<compile_context>
chip_gen: v7x
topology: tpu7x:2x2x1
jax: 0.10.0
libtpu: 0.0.40
codegen_flags: <defaults>
</compile_context>

<pallas_src>
import functools

import jax
import jax.numpy as jnp
import numpy as np
from jax import lax
from jax.experimental import pallas as pl
from jax.experimental.pallas import tpu as pltpu

_LANE = 128


def _vmem_capacity_bytes():
    try:
        cap = getattr(pltpu.get_tpu_info(), "vmem_capacity_bytes", None)
        if cap:
            return int(cap)
    except Exception:
        pass
    return 64 * 1024 * 1024            # conservative default (v7x per-core VMEM)


_VMEM_CAP = _vmem_capacity_bytes()
_VMEM_LIMIT = min(int(0.75 * _VMEM_CAP), 100 * 1024 * 1024)
_STEP_BUDGET = max(int(0.30 * _VMEM_CAP), 8 * 1024 * 1024)


# ----------------------------------------------------------------------------
# Kernel A: fused [3x3 stride-2 conv (one MXU matmul on the im2col stack) +
# 2x2 stride-2 max-pool + channel concat] for one (batch, row-strip) grid
# step, plus per-step BN partial statistics.
#
#   p_ref     : (1, 9*C_in, T)  bf16 im2col taps, spatial on lanes
#   y_ref     : (1, C_out, T)   bf16 channel-major output tile (flat NCHW)
#   stats_ref : (1, 1, 2, C_out) per-step [sum, sum_sq] (reduced in XLA)
# ----------------------------------------------------------------------------
def _conv_pool_kernel(p_ref, w_ref, b_ref, y_ref, stats_ref, *, C_in):
    patch = p_ref[0]                                           # (9*C_in, T) bf16

    # 3x3 stride-2 conv (pad 1): ONE MXU matmul, bf16 operands, f32 accumulation
    conv = jnp.dot(w_ref[...], patch,
                   preferred_element_type=jnp.float32)         # (C_conv, T) f32
    conv = conv + b_ref[...]                                   # bias (C_conv, 1)

    # 2x2 stride-2 max-pool: sublane row-groups of the same patch block
    # (taps (1,1),(1,2),(2,1),(2,2); they never touch the zero padding).
    def rows(tap):
        return patch[tap * C_in:(tap + 1) * C_in]              # (C_in, T) bf16
    pool = jnp.maximum(jnp.maximum(rows(4), rows(5)),
                       jnp.maximum(rows(7), rows(8))).astype(jnp.float32)

    # torch.cat([conv_out, pool_out], channel)  (sublane-direction concat)
    y = jnp.concatenate([conv, pool], axis=0)                  # (C_out, T) f32

    # per-step partial BatchNorm statistics (f32, lane-axis reductions)
    stats_ref[0, 0] = jnp.stack(
        [jnp.sum(y, axis=1), jnp.sum(y * y, axis=1)], axis=0)  # (2, C_out)

    # channel-major, lane-dense bf16 store (already the final flat-NCHW layout)
    y_ref[0] = y.astype(y_ref.dtype)


# ----------------------------------------------------------------------------
# Kernel B: elementwise BatchNorm affine (precomputed scale/shift, f32 math)
# + ReLU in the channel-major / lane-dense layout (pure streaming pass).
# ----------------------------------------------------------------------------
def _bn_relu_kernel(y_ref, scale_ref, shift_ref, o_ref):
    y = y_ref[0].astype(jnp.float32)                           # (C_out, TB)
    o_ref[0] = jnp.maximum(y * scale_ref[...] + shift_ref[...],
                           0.0).astype(o_ref.dtype)


# ----------------------------------------------------------------------------
# tiling heuristics (generation aware via _STEP_BUDGET / _VMEM_LIMIT)
# ----------------------------------------------------------------------------
def _step_bytes_a(T, C_in, C_conv, C_out):
    io = 2 * (9 * C_in * T * 2 + C_out * T * 2 + 2 * C_out * 4)   # dbl-buffered blocks
    live = (9 * C_in * 2 + C_conv * 4 + C_in * 4 + C_out * 4 + C_out * 2) * T
    return io + live


def _pick_rows(N, H2, W2, C_in, C_conv, C_out, budget):
    """Rows per kernel-A strip: largest divisor of H2 fitting the VMEM budget,
    with the strip's flattened extent lane-aligned (or the full image)."""
    divs = [d for d in range(1, H2 + 1) if H2 % d == 0]
    aligned = [d for d in divs if (d * W2) % _LANE == 0 or d == H2]
    fitting = [d for d in aligned
               if _step_bytes_a(d * W2, C_in, C_conv, C_out) <= budget]
    th = max(fitting) if fitting else min(aligned)
    if N * (H2 // th) < 2:                 # keep >= 2 grid steps (v7x megacore)
        smaller = [d for d in (fitting or aligned) if d < th]
        if smaller:
            th = max(smaller)
    return th


def _pick_bn_tile(P, C_out, budget):
    """Kernel B tile: large, lane-dense, decoupled from kernel A's strips."""
    per_elem = C_out * (2 + 4) * 2         # bf16 in + f32 out, double buffered
    cap = max(_LANE, budget // per_elem)
    divs = [d for d in range(1, P + 1) if P % d == 0]
    m128 = [d for d in divs if d % _LANE == 0 and d <= cap]
    if m128:
        return max(m128)
    if P <= cap:
        return P
    return max(d for d in divs if d <= cap)


@jax.jit
def downsampler_block(x_nchw, conv_w, conv_b, gamma, beta):
    """DownsamplerBlock forward (training-mode BatchNorm). x_nchw: (N,C_in,H,W) f32."""
    eps = 1e-3
    N, C_in, H, W = x_nchw.shape
    # TODO(synk): odd H/W (where the PyTorch F.pad(x1) branch kicks in) is not
    #             handled; it is a no-op for even inputs.
    assert H % 2 == 0 and W % 2 == 0
    C_conv = conv_w.shape[0]
    C_out = C_conv + C_in
    H2, W2 = H // 2, W // 2
    P = H2 * W2

    TH = _pick_rows(N, H2, W2, C_in, C_conv, C_out, _STEP_BUDGET)
    S = H2 // TH
    T = TH * W2

    # --- XLA glue: stay NCHW, zero-pad spatially, and lay the nine 3x3
    #     stride-2 taps out as a flattened, lane-dense im2col stack
    #       taps[n, (kh*3+kw)*C_in + c, oh*W2 + ow] = pad(x)[n, c, 2*oh+kh, 2*ow+kw]
    #     (bf16: consumed only as MXU operands / max-pool taps).  For C_in=3
    #     this stack is ~2.25x the tiny input and replaces the old lane-sparse
    #     NHWC transpose+pad pass with dense DMAs and zero in-kernel relayout.
    xp = jnp.pad(x_nchw.astype(jnp.float32), ((0, 0), (0, 0), (1, 1), (1, 1)))
    taps = jnp.stack([xp[:, :, kh:kh + H:2, kw:kw + W:2]
                      for kh in range(3) for kw in range(3)], axis=1)
    taps = taps.astype(jnp.bfloat16).reshape(N, 9 * C_in, P)

    # weights as an im2col matrix, columns ordered (kh, kw, c); bf16 for the MXU
    w_mat = jnp.transpose(conv_w, (0, 2, 3, 1)).reshape(C_conv, 9 * C_in)
    w_mat = w_mat.astype(jnp.bfloat16)
    b2 = conv_b.reshape(C_conv, 1).astype(jnp.float32)

    kernel_a = functools.partial(_conv_pool_kernel, C_in=C_in)
    y, stats = pl.pallas_call(
        kernel_a,
        out_shape=(jax.ShapeDtypeStruct((N, C_out, P), jnp.bfloat16),
                   jax.ShapeDtypeStruct((N, S, 2, C_out), jnp.float32)),
        grid=(N, S),
        in_specs=[
            pl.BlockSpec((1, 9 * C_in, T), lambda n, s: (n, 0, s)),
            pl.BlockSpec((C_conv, 9 * C_in), lambda n, s: (0, 0)),
            pl.BlockSpec((C_conv, 1), lambda n, s: (0, 0)),
        ],
        out_specs=(
            pl.BlockSpec((1, C_out, T), lambda n, s: (n, 0, s)),
            pl.BlockSpec((1, 1, 2, C_out), lambda n, s: (n, s, 0, 0)),
        ),
        compiler_params=pltpu.CompilerParams(
            dimension_semantics=("parallel", "parallel"),
            vmem_limit_bytes=_VMEM_LIMIT),
    )(taps, w_mat, b2)

    # --- BatchNorm2d training mode: batch mean + biased variance (tiny f32
    #     reduction of the per-step partials in XLA: N*S*2*C_out elements) ---
    # TODO(synk): sum / sum-of-squares can cancel for large activation means;
    #             switch to shifted sums if this pattern is reused at scale.
    ssum = jnp.sum(stats, axis=(0, 1))                          # (2, C_out)
    count = float(N * P)
    mean = ssum[0] / count
    var = ssum[1] / count - mean * mean                         # biased variance
    inv = lax.rsqrt(var + eps)
    g = gamma.astype(jnp.float32)
    scale = (g * inv).reshape(C_out, 1)
    shift = (beta.astype(jnp.float32) - mean * g * inv).reshape(C_out, 1)

    # --- kernel B: BN affine + ReLU, own (larger) lane-dense streaming tiles ---
    TB = _pick_bn_tile(P, C_out, _STEP_BUDGET)
    NB = P // TB
    out = pl.pallas_call(
        _bn_relu_kernel,
        out_shape=jax.ShapeDtypeStruct((N, C_out, P), jnp.float32),
        grid=(N, NB),
        in_specs=[
            pl.BlockSpec((1, C_out, TB), lambda n, j: (n, 0, j)),
            pl.BlockSpec((C_out, 1), lambda n, j: (0, 0)),
            pl.BlockSpec((C_out, 1), lambda n, j: (0, 0)),
        ],
        out_specs=pl.BlockSpec((1, C_out, TB), lambda n, j: (n, 0, j)),
        compiler_params=pltpu.CompilerParams(
            dimension_semantics=("parallel", "parallel"),
            vmem_limit_bytes=_VMEM_LIMIT),
    )(y, scale, shift)
    # TODO(synk): emit bf16 here / fuse BN+ReLU into the next stage's conv if
    #             the consumer accepts it (halves this pass's HBM write-back).

    # free reshape: (N, C_out, H2*W2) -> (N, C_out, H2, W2); already NCHW.
    return out.reshape(N, C_out, H2, W2)


# --- pure-JAX f32 reference (same semantics as the PyTorch forward, training BN) ---
def _reference(x, conv_w, conv_b, gamma, beta, eps=1e-3):
    conv = lax.conv_general_dilated(x, conv_w, (2, 2), ((1, 1), (1, 1)),
                                    dimension_numbers=("NCHW", "OIHW", "NCHW"))
    conv = conv + conv_b[None, :, None, None]
    pool = lax.reduce_window(x, -jnp.inf, lax.max, (1, 1, 2, 2), (1, 1, 2, 2), "VALID")
    y = jnp.concatenate([conv, pool], axis=1)
    mean = jnp.mean(y, axis=(0, 2, 3), keepdims=True)
    var = jnp.mean((y - mean) ** 2, axis=(0, 2, 3), keepdims=True)
    out = (y - mean) * lax.rsqrt(var + eps) * gamma[None, :, None, None] \
          + beta[None, :, None, None]
    return jnp.maximum(out, 0.0)


if __name__ == "__main__":
    # Shapes consistent with Encoder.initial_block = DownsamplerBlock(3, 32)
    N, C_in, C_out, H, W = 2, 3, 32, 16, 16
    C_conv = C_out - C_in

    key = jax.random.PRNGKey(0)
    kx, kw, kb, kg, kbe = jax.random.split(key, 5)
    x = jax.random.normal(kx, (N, C_in, H, W), jnp.float32)
    conv_w = 0.2 * jax.random.normal(kw, (C_conv, C_in, 3, 3), jnp.float32)
    conv_b = 0.1 * jax.random.normal(kb, (C_conv,), jnp.float32)
    gamma = 1.0 + 0.1 * jax.random.normal(kg, (C_out,), jnp.float32)
    beta = 0.1 * jax.random.normal(kbe, (C_out,), jnp.float32)

    out = jax.block_until_ready(downsampler_block(x, conv_w, conv_b, gamma, beta))
    ref = jax.block_until_ready(_reference(x, conv_w, conv_b, gamma, beta))

    assert out.shape == (N, C_out, H // 2, W // 2)
    # tolerance accounts for the bf16 im2col taps and the bf16 `y` intermediate
    np.testing.assert_allclose(np.asarray(out), np.asarray(ref), rtol=5e-2, atol=5e-2)
    print("KERNEL_OK")
</pallas_src>

<mosaic_0001>
module attributes {stable_mosaic.version = 11 : i64} {
  func.func @_conv_pool_kernel(%arg0: i32, %arg1: i32, %arg2: memref<1x27x64xbf16, #tpu.memory_space<vmem>>, %arg3: memref<29x27xbf16, #tpu.memory_space<vmem>>, %arg4: memref<29x1xf32, #tpu.memory_space<vmem>>, %arg5: memref<1x32x64xbf16, #tpu.memory_space<vmem>>, %arg6: memref<1x1x2x32xf32, #tpu.memory_space<vmem>>) attributes {dimension_semantics = [#tpu.dimension_semantics<parallel>, #tpu.dimension_semantics<parallel>], iteration_bounds = array<i64: 2, 1>, scalar_prefetch = 0 : i64, scratch_operands = 0 : i64, tpu.core_type = #tpu.core_type<tc>, window_params = [{transform_indices = @transform_0, window_bounds = array<i64: 1, 27, 64>}, {pipeline_mode = #tpu.pipeline_mode<synchronous>, transform_indices = @transform_1, window_bounds = array<i64: 29, 27>}, {pipeline_mode = #tpu.pipeline_mode<synchronous>, transform_indices = @transform_2, window_bounds = array<i64: 29, 1>}, {transform_indices = @transform_3, window_bounds = array<i64: 1, 32, 64>}, {transform_indices = @transform_4, window_bounds = array<i64: 1, 1, 2, 32>}]} {
    %c0 = arith.constant 0 : index
    %c0_0 = arith.constant 0 : index
    %c0_1 = arith.constant 0 : index
    %0 = vector.load %arg2[%c0, %c0_0, %c0_1] : memref<1x27x64xbf16, #tpu.memory_space<vmem>>, vector<1x27x64xbf16>
    %1 = vector.shape_cast %0 : vector<1x27x64xbf16> to vector<27x64xbf16>
    %c0_2 = arith.constant 0 : index
    %c0_3 = arith.constant 0 : index
    %2 = vector.load %arg3[%c0_2, %c0_3] : memref<29x27xbf16, #tpu.memory_space<vmem>>, vector<29x27xbf16>
    %cst = arith.constant dense<0.000000e+00> : vector<29x64xf32>
    %3 = tpu.matmul %2, %1, %cst {dimension_numbers = #tpu.dot_dimension_numbers<[1], [0], [0], [1], [0, 0, 1, 1], [], []>} : vector<29x27xbf16>, vector<27x64xbf16>, vector<29x64xf32> -> vector<29x64xf32>
    %c0_4 = arith.constant 0 : index
    %c0_5 = arith.constant 0 : index
    %4 = vector.load %arg4[%c0_4, %c0_5] : memref<29x1xf32, #tpu.memory_space<vmem>>, vector<29x1xf32>
    %5 = vector.broadcast %4 : vector<29x1xf32> to vector<29x64xf32>
    %6 = arith.addf %3, %5 : vector<29x64xf32>
    %7 = vector.extract_strided_slice %1 {offsets = [12, 0], sizes = [3, 64], strides = [1, 1]} : vector<27x64xbf16> to vector<3x64xbf16>
    %8 = vector.extract_strided_slice %1 {offsets = [15, 0], sizes = [3, 64], strides = [1, 1]} : vector<27x64xbf16> to vector<3x64xbf16>
    %9 = arith.maximumf %7, %8 : vector<3x64xbf16>
    %10 = vector.extract_strided_slice %1 {offsets = [21, 0], sizes = [3, 64], strides = [1, 1]} : vector<27x64xbf16> to vector<3x64xbf16>
    %11 = vector.extract_strided_slice %1 {offsets = [24, 0], sizes = [3, 64], strides = [1, 1]} : vector<27x64xbf16> to vector<3x64xbf16>
    %12 = arith.maximumf %10, %11 : vector<3x64xbf16>
    %13 = arith.maximumf %9, %12 : vector<3x64xbf16>
    %14 = arith.extf %13 : vector<3x64xbf16> to vector<3x64xf32>
    %15 = tpu.concatenate %6, %14 in 0 : vector<29x64xf32>, vector<3x64xf32> -> vector<32x64xf32>
    %cst_6 = arith.constant dense<0.000000e+00> : vector<32xf32>
    %16 = vector.multi_reduction <add>, %15, %cst_6 [1] : vector<32x64xf32> to vector<32xf32>
    %17 = arith.mulf %15, %15 : vector<32x64xf32>
    %cst_7 = arith.constant dense<0.000000e+00> : vector<32xf32>
    %18 = vector.multi_reduction <add>, %17, %cst_7 [1] : vector<32x64xf32> to vector<32xf32>
    %19 = vector.shape_cast %16 : vector<32xf32> to vector<1x32xf32>
    %20 = vector.shape_cast %18 : vector<32xf32> to vector<1x32xf32>
    %21 = tpu.concatenate %19, %20 in 0 : vector<1x32xf32>, vector<1x32xf32> -> vector<2x32xf32>
    %c0_8 = arith.constant 0 : index
    %c0_9 = arith.constant 0 : index
    %c0_10 = arith.constant 0 : index
    %c0_11 = arith.constant 0 : index
    %22 = vector.load %arg6[%c0_8, %c0_9, %c0_10, %c0_11] : memref<1x1x2x32xf32, #tpu.memory_space<vmem>>, vector<1x1x2x32xf32>
    %23 = vector.shape_cast %22 : vector<1x1x2x32xf32> to vector<2x32xf32>
    %24 = vector.shape_cast %21 : vector<2x32xf32> to vector<1x1x2x32xf32>
    tpu.vector_store %arg6[%c0_8, %c0_9, %c0_10, %c0_11], %24 {strides = array<i32>} : memref<1x1x2x32xf32, #tpu.memory_space<vmem>>, vector<1x1x2x32xf32>,
    %25 = arith.truncf %15 : vector<32x64xf32> to vector<32x64xbf16>
    %c0_12 = arith.constant 0 : index
    %c0_13 = arith.constant 0 : index
    %c0_14 = arith.constant 0 : index
    %26 = vector.load %arg5[%c0_12, %c0_13, %c0_14] : memref<1x32x64xbf16, #tpu.memory_space<vmem>>, vector<1x32x64xbf16>
    %27 = vector.shape_cast %26 : vector<1x32x64xbf16> to vector<32x64xbf16>
    %28 = vector.shape_cast %25 : vector<32x64xbf16> to vector<1x32x64xbf16>
    tpu.vector_store %arg5[%c0_12, %c0_13, %c0_14], %28 {strides = array<i32>} : memref<1x32x64xbf16, #tpu.memory_space<vmem>>, vector<1x32x64xbf16>,
    return
  }
  func.func @transform_0(%arg0: i32, %arg1: i32) -> (i32, i32, i32) {
    %c0_i32 = arith.constant 0 : i32
    %c0_i32_0 = arith.constant 0 : i32
    return %arg0, %c0_i32, %arg1 : i32, i32, i32
  }
  func.func @transform_1(%arg0: i32, %arg1: i32) -> (i32, i32) {
    %c0_i32 = arith.constant 0 : i32
    %c0_i32_0 = arith.constant 0 : i32
    %c0_i32_1 = arith.constant 0 : i32
    return %c0_i32, %c0_i32_0 : i32, i32
  }
  func.func @transform_2(%arg0: i32, %arg1: i32) -> (i32, i32) {
    %c0_i32 = arith.constant 0 : i32
    %c0_i32_0 = arith.constant 0 : i32
    %c0_i32_1 = arith.constant 0 : i32
    return %c0_i32, %c0_i32_0 : i32, i32
  }
  func.func @transform_3(%arg0: i32, %arg1: i32) -> (i32, i32, i32) {
    %c0_i32 = arith.constant 0 : i32
    %c0_i32_0 = arith.constant 0 : i32
    return %arg0, %c0_i32, %arg1 : i32, i32, i32
  }
  func.func @transform_4(%arg0: i32, %arg1: i32) -> (i32, i32, i32, i32) {
    %c0_i32 = arith.constant 0 : i32
    %c0_i32_0 = arith.constant 0 : i32
    %c0_i32_1 = arith.constant 0 : i32
    return %arg0, %arg1, %c0_i32, %c0_i32_0 : i32, i32, i32, i32
  }
}

module attributes {stable_mosaic.version = 11 : i64} {
  func.func @_bn_relu_kernel(%arg0: i32, %arg1: i32, %arg2: memref<1x32x64xbf16, #tpu.memory_space<vmem>>, %arg3: memref<32x1xf32, #tpu.memory_space<vmem>>, %arg4: memref<32x1xf32, #tpu.memory_space<vmem>>, %arg5: memref<1x32x64xf32, #tpu.memory_space<vmem>>) attributes {dimension_semantics = [#tpu.dimension_semantics<parallel>, #tpu.dimension_semantics<parallel>], iteration_bounds = array<i64: 2, 1>, scalar_prefetch = 0 : i64, scratch_operands = 0 : i64, tpu.core_type = #tpu.core_type<tc>, window_params = [{transform_indices = @transform_0, window_bounds = array<i64: 1, 32, 64>}, {pipeline_mode = #tpu.pipeline_mode<synchronous>, transform_indices = @transform_1, window_bounds = array<i64: 32, 1>}, {pipeline_mode = #tpu.pipeline_mode<synchronous>, transform_indices = @transform_2, window_bounds = array<i64: 32, 1>}, {transform_indices = @transform_3, window_bounds = array<i64: 1, 32, 64>}]} {
    %c0 = arith.constant 0 : index
    %c0_0 = arith.constant 0 : index
    %c0_1 = arith.constant 0 : index
    %0 = vector.load %arg2[%c0, %c0_0, %c0_1] : memref<1x32x64xbf16, #tpu.memory_space<vmem>>, vector<1x32x64xbf16>
    %1 = vector.shape_cast %0 : vector<1x32x64xbf16> to vector<32x64xbf16>
    %2 = arith.extf %1 : vector<32x64xbf16> to vector<32x64xf32>
    %c0_2 = arith.constant 0 : index
    %c0_3 = arith.constant 0 : index
    %3 = vector.load %arg3[%c0_2, %c0_3] : memref<32x1xf32, #tpu.memory_space<vmem>>, vector<32x1xf32>
    %4 = vector.broadcast %3 : vector<32x1xf32> to vector<32x64xf32>
    %5 = arith.mulf %2, %4 : vector<32x64xf32>
    %c0_4 = arith.constant 0 : index
    %c0_5 = arith.constant 0 : index
    %6 = vector.load %arg4[%c0_4, %c0_5] : memref<32x1xf32, #tpu.memory_space<vmem>>, vector<32x1xf32>
    %7 = vector.broadcast %6 : vector<32x1xf32> to vector<32x64xf32>
    %8 = arith.addf %5, %7 : vector<32x64xf32>
    %cst = arith.constant 0.000000e+00 : f32
    %9 = vector.broadcast %cst : f32 to vector<32x64xf32>
    %10 = arith.maximumf %8, %9 : vector<32x64xf32>
    %c0_6 = arith.constant 0 : index
    %c0_7 = arith.constant 0 : index
    %c0_8 = arith.constant 0 : index
    %11 = vector.load %arg5[%c0_6, %c0_7, %c0_8] : memref<1x32x64xf32, #tpu.memory_space<vmem>>, vector<1x32x64xf32>
    %12 = vector.shape_cast %11 : vector<1x32x64xf32> to vector<32x64xf32>
    %13 = vector.shape_cast %10 : vector<32x64xf32> to vector<1x32x64xf32>
    tpu.vector_store %arg5[%c0_6, %c0_7, %c0_8], %13 {strides = array<i32>} : memref<1x32x64xf32, #tpu.memory_space<vmem>>, vector<1x32x64xf32>,
    return
  }
  func.func @transform_0(%arg0: i32, %arg1: i32) -> (i32, i32, i32) {
    %c0_i32 = arith.constant 0 : i32
    %c0_i32_0 = arith.constant 0 : i32
    return %arg0, %c0_i32, %arg1 : i32, i32, i32
  }
  func.func @transform_1(%arg0: i32, %arg1: i32) -> (i32, i32) {
    %c0_i32 = arith.constant 0 : i32
    %c0_i32_0 = arith.constant 0 : i32
    %c0_i32_1 = arith.constant 0 : i32
    return %c0_i32, %c0_i32_0 : i32, i32
  }
  func.func @transform_2(%arg0: i32, %arg1: i32) -> (i32, i32) {
    %c0_i32 = arith.constant 0 : i32
    %c0_i32_0 = arith.constant 0 : i32
    %c0_i32_1 = arith.constant 0 : i32
    return %c0_i32, %c0_i32_0 : i32, i32
  }
  func.func @transform_3(%arg0: i32, %arg1: i32) -> (i32, i32, i32) {
    %c0_i32 = arith.constant 0 : i32
    %c0_i32_0 = arith.constant 0 : i32
    return %arg0, %c0_i32, %arg1 : i32, i32, i32
  }
}

</mosaic_0001>

<llo_original>
// kernel: downsampler_block.3
$region0: #{downsampler_block.3}
  #allocation0 [shape = 'u32[]', space=smem, size = 0x4, offset = 0x4, fixed_abs, tag = 'smem constant byte address 0x4 - core index']
  #allocation1 [shape = 'u32[144,128]{1,0:T(1,128)}', space=vmem, size = 0x12000, scoped, tag = 'internal scratch']
  %s0 = inlined_call_operand.vmem [shape: bf16[2,32,64], index: 0, kind: input, shape index: {}]
  %s1 = inlined_call_operand.vmem [shape: f32[32,1], index: 1, kind: input, shape index: {}]
  %s2 = inlined_call_operand.vmem [shape: f32[32,1], index: 2, kind: input, shape index: {}]
  %s3 = inlined_call_operand.vmem [shape: f32[2,32,64], index: 3, kind: output, shape index: {}]
  %s4 = sld [smem:[#allocation0]]
  $region45: #{downsampler_block.3} parent=0
    _
  %s6 = ssub.s32 1, %s4
  %s7 = scalar_select 0, %s6, %s4
  loop: start=0, step=1, limit=4
  $region2: #{downsampler_block.3} parent=0 // loop_pre_header
    _
  $region3: #{downsampler_block.3} parent=0 // loop_header
    %s9 = sphi 0, %s13
    %p10 = scmp.ge.s32.totalorder %s9, 4
    %s16 = sphi 0, %s28
    %s17 = sphi 0, %s24
    %s18 = sphi 0, %s16
    %s19 = sphi 0, %s17
    %s20 = sphi 0, %s18
    %s21 = sphi 0, %s19
    %s33 = sphi 0, %s35
    %s36 = sphi 0, %s33
    %s37 = sphi 0, %s36
    %s53 = sphi 0, %s37
    %s57 = sphi 0, %s57
    %s59 = sphi 0, %s57
    %s60 = sphi 0, %s59
    %s74 = sphi 0, %s60
    %s78 = sphi 0, %s78
    %s80 = sphi 0, %s78
    %s81 = sphi 0, %s80
    %s95 = sphi 0, %s81
    %s103 = sphi 0, %s105
    %s106 = sphi 0, %s103
    %s107 = sphi 0, %s106
    %s123 = sphi 0, %s107
  $region4: #{downsampler_block.3} parent=0 // loop_header_branch
    %12 = sbr.rel (%p10) target = $region8
  $region5: #{downsampler_block.3} parent=0 // loop_body
    %s14 = ssub.s32 %s9, 1
    %s15 = ssub.s32 %s9, 2
    %s22 = sadd.s32 1, %s17
    %p23 = scmp.ge.s32.totalorder %s22, 1
    %s24 = scalar_select %p23, 0, %s22
    %s25 = sadd.s32 1, %s16
    %s26 = scalar_select %p23, %s25, %s16
    %p27 = scmp.ge.s32.totalorder %s26, 2
    %s28 = scalar_select %p27, 0, %s26
    %s29 = ssub.s32 %s16, %s28
    %s30 = ssub.s32 %s17, %s24
    %s31 = sor.u32 %s29, %s30
    %p32 = scmp.eq.s32.totalorder %s31, 0
    %s34 = sadd.s32 %s33, 1
    %s35 = scalar_select %p32, %s33, %s34
    %p38 = pneg %p32
    %p39 = scmp.eq.s32.totalorder %s9, 1
    %p40 = por %p38, %p39
    %p41 = scmp.ne.s32.totalorder %s33, %s36
    %p42 = scmp.eq.s32.totalorder %s9, 0
    %p43 = por %p41, %p42
    %p44 = scmp.ne.s32.totalorder %s33, %s36
    %p45 = scmp.eq.s32.totalorder %s14, 1
    %p46 = por %p44, %p45
    %p47 = scmp.ne.s32.totalorder %s36, %s37
    %p48 = scmp.eq.s32.totalorder %s14, 0
    %p49 = por %p47, %p48
    %p50 = scmp.ne.s32.totalorder %s36, %s37
    %p51 = scmp.eq.s32.totalorder %s15, 1
    %p52 = por %p50, %p51
    %p54 = scmp.ne.s32.totalorder %s37, %s53
    %p55 = scmp.eq.s32.totalorder %s15, 0
    %p56 = por %p54, %p55
    %s58 = sadd.s32 %s57, 1
    %p61 = scmp.eq.s32.totalorder %s9, 1
    %p62 = scmp.ne.s32.totalorder %s57, %s59
    %p63 = scmp.eq.s32.totalorder %s9, 0
    %p64 = por %p62, %p63
    %p65 = scmp.ne.s32.totalorder %s57, %s59
    %p66 = scmp.eq.s32.totalorder %s14, 1
    %p67 = por %p65, %p66
    %p68 = scmp.ne.s32.totalorder %s59, %s60
    %p69 = scmp.eq.s32.totalorder %s14, 0
    %p70 = por %p68, %p69
    %p71 = scmp.ne.s32.totalorder %s59, %s60
    %p72 = scmp.eq.s32.totalorder %s15, 1
    %p73 = por %p71, %p72
    %p75 = scmp.ne.s32.totalorder %s60, %s74
    %p76 = scmp.eq.s32.totalorder %s15, 0
    %p77 = por %p75, %p76
    %s79 = sadd.s32 %s78, 1
    %p82 = scmp.eq.s32.totalorder %s9, 1
    %p83 = scmp.ne.s32.totalorder %s78, %s80
    %p84 = scmp.eq.s32.totalorder %s9, 0
    %p85 = por %p83, %p84
    %p86 = scmp.ne.s32.totalorder %s78, %s80
    %p87 = scmp.eq.s32.totalorder %s14, 1
    %p88 = por %p86, %p87
    %p89 = scmp.ne.s32.totalorder %s80, %s81
    %p90 = scmp.eq.s32.totalorder %s14, 0
    %p91 = por %p89, %p90
    %p92 = scmp.ne.s32.totalorder %s80, %s81
    %p93 = scmp.eq.s32.totalorder %s15, 1
    %p94 = por %p92, %p93
    %p96 = scmp.ne.s32.totalorder %s81, %s95
    %p97 = scmp.eq.s32.totalorder %s15, 0
    %p98 = por %p96, %p97
    %s99 = ssub.s32 %s16, %s28
    %s100 = ssub.s32 %s17, %s24
    %s101 = sor.u32 %s99, %s100
    %p102 = scmp.eq.s32.totalorder %s101, 0
    %s104 = sadd.s32 %s103, 1
    %s105 = scalar_select %p102, %s103, %s104
    %p108 = pneg %p102
    %p109 = scmp.eq.s32.totalorder %s9, 1
    %p110 = por %p108, %p109
    %p111 = scmp.ne.s32.totalorder %s103, %s106
    %p112 = scmp.eq.s32.totalorder %s9, 0
    %p113 = por %p111, %p112
    %p114 = scmp.ne.s32.totalorder %s103, %s106
    %p115 = scmp.eq.s32.totalorder %s14, 1
    %p116 = por %p114, %p115
    %p117 = scmp.ne.s32.totalorder %s106, %s107
    %p118 = scmp.eq.s32.totalorder %s14, 0
    %p119 = por %p117, %p118
    %p120 = scmp.ne.s32.totalorder %s106, %s107
    %p121 = scmp.eq.s32.totalorder %s15, 1
    %p122 = por %p120, %p121
    %p124 = scmp.ne.s32.totalorder %s107, %s123
    %p125 = scmp.eq.s32.totalorder %s15, 0
    %p126 = por %p124, %p125
    %p127 = scmp.le.s32.totalorder 1, %s9
    %p128 = scmp.lt.s32.totalorder %s9, 3
    %p129 = pnand %p127, %p128
    %p130 = pneg %p129
    // Predicated region
    $region9: #{downsampler_block.3} parent=5 // pred_check
      _
    $region10: #{downsampler_block.3} parent=5 // pred_check_branch
      %132 = sbr.rel (%p129) target = $region12
    $region11: #{downsampler_block.3} parent=5 // pred_region
      %s133 = ssub.s32 %s9, 1
      // Predicated region
      $region13: #{downsampler_block.3} parent=11 // pred_check
        %p134 = pneg %p70
      $region14: #{downsampler_block.3} parent=11 // pred_check_branch
        %136 = sbr.rel (%p134) target = $region16
      $region15: #{downsampler_block.3} parent=11 // pred_region
        _
      $region16: #{downsampler_block.3} parent=11 // pred_fallthru
        _
      // Predicated region
      $region17: #{downsampler_block.3} parent=11 // pred_check
        %p137 = pneg %p91
      $region18: #{downsampler_block.3} parent=11 // pred_check_branch
        %139 = sbr.rel (%p137) target = $region20
      $region19: #{downsampler_block.3} parent=11 // pred_region
        _
      $region20: #{downsampler_block.3} parent=11 // pred_fallthru
        _
    $region12: #{downsampler_block.3} parent=5 // pred_fallthru
      _
    %p140 = scmp.lt.s32.totalorder %s9, 2
    // Predicated region
    $region21: #{downsampler_block.3} parent=5 // pred_check
      %p141 = pneg %p140
    $region22: #{downsampler_block.3} parent=5 // pred_check_branch
      %143 = sbr.rel (%p141) target = $region24
    $region23: #{downsampler_block.3} parent=5 // pred_region
      // Predicated region
      $region25: #{downsampler_block.3} parent=23 // pred_check
        %p144 = pneg %p43
      $region26: #{downsampler_block.3} parent=23 // pred_check_branch
        %146 = sbr.rel (%p144) target = $region28
      $region27: #{downsampler_block.3} parent=23 // pred_region
        %p147 = scmp.lt.s32.totalorder %s16, 1
        %s148 = scalar_select %p147, %s16, 1
        %p149 = scmp.lt.s32.totalorder %s17, 0
        %s150 = scalar_select %p149, %s17, 0
        %s151 = smul.addr %s148, 4
        %s152 = sadd.s32 %s150, %s151
        %s153 = smul.addr %s152, 4
        %s154 = scalar_lea.vmem %s0, %s153
      $region28: #{downsampler_block.3} parent=23 // pred_fallthru
        _
    $region24: #{downsampler_block.3} parent=5 // pred_fallthru
      _
    %p155 = scmp.le.s32.totalorder 1, %s9
    %p156 = scmp.lt.s32.totalorder %s9, 3
    %p157 = pnand %p155, %p156
    %p158 = pneg %p157
    // Predicated region
    $region29: #{downsampler_block.3} parent=5 // pred_check
      _
    $region30: #{downsampler_block.3} parent=5 // pred_check_branch
      %160 = sbr.rel (%p157) target = $region32
    $region31: #{downsampler_block.3} parent=5 // pred_region
      %s161 = ssub.s32 %s9, 1
      %p162 = scmp.lt.s32.totalorder %s18, 1
      %s163 = scalar_select %p162, %s18, 1
      %p164 = scmp.lt.s32.totalorder %s19, 0
      %s165 = scalar_select %p164, %s19, 0
      %s166 = smul.addr %s163, 4
      %s167 = sadd.s32 %s165, %s166
      %s168 = smul.addr %s167, 4
      %s169 = scalar_lea.vmem %s0, %s168
      %p170 = pneg %p49
      %p171 = pneg %p46
      %p172 = pneg %p70
      %p173 = pneg %p67
      %p174 = pneg %p91
      %p175 = pneg %p88
      %p176 = pneg %p119
      %p177 = pneg %p116
      %p178 = scmp.lt.s32.totalorder %s18, 1
      %s179 = scalar_select %p178, %s18, 1
      %p180 = scmp.lt.s32.totalorder %s19, 0
      %s181 = scalar_select %p180, %s19, 0
      %s182 = smul.addr %s179, 4
      %s183 = sadd.s32 %s181, %s182
      %s184 = smul.addr %s183, 8
      %s185 = scalar_lea.vmem %s3, %s184
      %p186 = scmp.lt.s32.totalorder %s18, 1
      %s187 = scalar_select %p186, %s18, 1
      %p188 = scmp.lt.s32.totalorder %s19, 0
      %s189 = scalar_select %p188, %s19, 0
      %s190 = smul.addr %s187, 4
      %s191 = sadd.s32 %s189, %s190
      %s192 = smul.addr %s191, 4
      %s193 = scalar_lea.vmem %s0, %s192
      %p194 = scmp.lt.s32.totalorder %s18, 1
      %s195 = scalar_select %p194, %s18, 1
      %p196 = scmp.lt.s32.totalorder %s19, 0
      %s197 = scalar_select %p196, %s19, 0
      %s198 = smul.addr %s195, 4
      %s199 = sadd.s32 %s197, %s198
      %s200 = smul.addr %s199, 8
      %s201 = scalar_lea.vmem %s3, %s200
      %v202 = vld [vmem:[%s193] sm:$0xf]
      %v203 = vld [vmem:[%s193 + $0x4] sm:$0xf]
      %v204 = vld [vmem:[%s193 + $0x8] sm:$0xf]
      %v205 = vld [vmem:[%s193 + $0xc] sm:$0xf]
      %v206 = vunpack.c.l.bf16 %v202
      %v207 = vunpack.c.l.bf16 %v203
      %v208 = vunpack.c.l.bf16 %v204
      %v209 = vunpack.c.l.bf16 %v205
      %v210 = vld [vmem:[%s1] sm:$0xff]
      %v211 = vld [vmem:[%s1 + $0x8] sm:$0xff]
      %v212 = vld [vmem:[%s1 + $0x10] sm:$0xff]
      %v213 = vld [vmem:[%s1 + $0x18] sm:$0xff]
      %215 = vset.pattern.permute.xlu0 0
      %216 = vperm.xlu0 %215, %v210
      %v217 = vpop.permute.xlu0 %216
      %220 = vset.pattern.permute.xlu0 0
      %221 = vperm.xlu0 %220, %v211
      %v222 = vpop.permute.xlu0 %221
      %225 = vset.pattern.permute.xlu0 0
      %226 = vperm.xlu0 %225, %v212
      %v227 = vpop.permute.xlu0 %226
      %230 = vset.pattern.permute.xlu0 0
      %231 = vperm.xlu0 %230, %v213
      %v232 = vpop.permute.xlu0 %231
      %v234 = vmul.f32 %v206, %v217
      %v235 = vmul.f32 %v207, %v222
      %v236 = vmul.f32 %v208, %v227
      %v237 = vmul.f32 %v209, %v232
      %v238 = vld [vmem:[%s2] sm:$0xff]
      %v239 = vld [vmem:[%s2 + $0x8] sm:$0xff]
      %v240 = vld [vmem:[%s2 + $0x10] sm:$0xff]
      %v241 = vld [vmem:[%s2 + $0x18] sm:$0xff]
      %243 = vset.pattern.permute.xlu0 0
      %244 = vperm.xlu0 %243, %v238
      %v245 = vpop.permute.xlu0 %244
      %248 = vset.pattern.permute.xlu0 0
      %249 = vperm.xlu0 %248, %v239
      %v250 = vpop.permute.xlu0 %249
      %253 = vset.pattern.permute.xlu0 0
      %254 = vperm.xlu0 %253, %v240
      %v255 = vpop.permute.xlu0 %254
      %258 = vset.pattern.permute.xlu0 0
      %259 = vperm.xlu0 %258, %v241
      %v260 = vpop.permute.xlu0 %259
      %v262 = vadd.f32 %v234, %v245
      %v263 = vadd.f32 %v235, %v250
      %v264 = vadd.f32 %v236, %v255
      %v265 = vadd.f32 %v237, %v260
      %v266 = vmax.f32 %v262, 0.0
      %v267 = vmax.f32 %v263, 0.0
      %v268 = vmax.f32 %v264, 0.0
      %v269 = vmax.f32 %v265, 0.0
      %vm270 = vcmask 523264
      %271 = vst.msk [vmem:[%s201] sm:$0xff] %vm270, %v266
      %272 = vst.msk [vmem:[%s201 + $0x8] sm:$0xff] %vm270, %v267
      %273 = vst.msk [vmem:[%s201 + $0x10] sm:$0xff] %vm270, %v268
      %274 = vst.msk [vmem:[%s201 + $0x18] sm:$0xff] %vm270, %v269
      %p275 = scmp.lt.s32.totalorder %s18, 1
      %s276 = scalar_select %p275, %s18, 1
      %p277 = scmp.lt.s32.totalorder %s19, 0
      %s278 = scalar_select %p277, %s19, 0
      %s279 = smul.addr %s276, 4
      %s280 = sadd.s32 %s278, %s279
      %s281 = smul.addr %s280, 8
      %s282 = scalar_lea.vmem %s3, %s281
      // Predicated region
      $region33: #{downsampler_block.3} parent=31 // pred_check
        %p283 = pneg %p116
      $region34: #{downsampler_block.3} parent=31 // pred_check_branch
        %285 = sbr.rel (%p283) target = $region36
      $region35: #{downsampler_block.3} parent=31 // pred_region
        _
      $region36: #{downsampler_block.3} parent=31 // pred_fallthru
        _
    $region32: #{downsampler_block.3} parent=5 // pred_fallthru
      _
    %p286 = scmp.le.s32.totalorder 2, %s9
    // Predicated region
    $region37: #{downsampler_block.3} parent=5 // pred_check
      %p287 = pneg %p286
    $region38: #{downsampler_block.3} parent=5 // pred_check_branch
      %289 = sbr.rel (%p287) target = $region40
    $region39: #{downsampler_block.3} parent=5 // pred_region
      %s290 = ssub.s32 %s9, 2
      // Predicated region
      $region41: #{downsampler_block.3} parent=39 // pred_check
        %p291 = pneg %p122
      $region42: #{downsampler_block.3} parent=39 // pred_check_branch
        %293 = sbr.rel (%p291) target = $region44
      $region43: #{downsampler_block.3} parent=39 // pred_region
        %p294 = scmp.lt.s32.totalorder %s20, 1
        %s295 = scalar_select %p294, %s20, 1
        %p296 = scmp.lt.s32.totalorder %s21, 0
        %s297 = scalar_select %p296, %s21, 0
        %s298 = smul.addr %s295, 4
        %s299 = sadd.s32 %s297, %s298
        %s300 = smul.addr %s299, 8
        %s301 = scalar_lea.vmem %s3, %s300
      $region44: #{downsampler_block.3} parent=39 // pred_fallthru
        _
    $region40: #{downsampler_block.3} parent=5 // pred_fallthru
      _
  $region6: #{downsampler_block.3} parent=0 // loop_footer
    %s13 = sadd.s32 1, %s9
  $region7: #{downsampler_block.3} parent=0 // loop_footer_branch
    %8 = sbr.rel target = $region3
  $region8: #{downsampler_block.3} parent=0 // loop_exit
    _

// kernel: downsampler_block.2
$region0: #{downsampler_block.2}
  #allocation0 [shape = 'u32[]', space=smem, size = 0x4, offset = 0x4, fixed_abs, tag = 'smem constant byte address 0x4 - core index']
  #allocation1 [shape = 'u32[144,128]{1,0:T(1,128)}', space=vmem, size = 0x12000, scoped, tag = 'internal scratch']
  %s0 = inlined_call_operand.vmem [shape: bf16[2,27,64], index: 0, kind: input, shape index: {}]
  %s1 = inlined_call_operand.vmem [shape: bf16[29,27], index: 1, kind: input, shape index: {}]
  %s2 = inlined_call_operand.vmem [shape: f32[29,1], index: 2, kind: input, shape index: {}]
  %s3 = inlined_call_operand.vmem [shape: bf16[2,32,64], index: 3, kind: output, shape index: {0}]
  %s4 = inlined_call_operand.vmem [shape: f32[2,1,2,32], index: 4, kind: output, shape index: {1}]
  %5 = xla_tuple %s3, %s4
  %s6 = sld [smem:[#allocation0]]
  $region53: #{downsampler_block.2} parent=0
    _
  %s8 = ssub.s32 1, %s6
  %s9 = scalar_select 0, %s8, %s6
  loop: start=0, step=1, limit=4
  $region2: #{downsampler_block.2} parent=0 // loop_pre_header
    _
  $region3: #{downsampler_block.2} parent=0 // loop_header
    %s11 = sphi 0, %s15
    %p12 = scmp.ge.s32.totalorder %s11, 4
    %s18 = sphi 0, %s30
    %s19 = sphi 0, %s26
    %s20 = sphi 0, %s18
    %s21 = sphi 0, %s19
    %s22 = sphi 0, %s20
    %s23 = sphi 0, %s21
    %s35 = sphi 0, %s37
    %s38 = sphi 0, %s35
    %s39 = sphi 0, %s38
    %s55 = sphi 0, %s39
    %s59 = sphi 0, %s59
    %s61 = sphi 0, %s59
    %s62 = sphi 0, %s61
    %s76 = sphi 0, %s62
    %s80 = sphi 0, %s80
    %s82 = sphi 0, %s80
    %s83 = sphi 0, %s82
    %s97 = sphi 0, %s83
    %s105 = sphi 0, %s107
    %s108 = sphi 0, %s105
    %s109 = sphi 0, %s108
    %s125 = sphi 0, %s109
    %s133 = sphi 0, %s135
    %s136 = sphi 0, %s133
    %s137 = sphi 0, %s136
    %s153 = sphi 0, %s137
  $region4: #{downsampler_block.2} parent=0 // loop_header_branch
    %14 = sbr.rel (%p12) target = $region8
  $region5: #{downsampler_block.2} parent=0 // loop_body
    %s16 = ssub.s32 %s11, 1
    %s17 = ssub.s32 %s11, 2
    %s24 = sadd.s32 1, %s19
    %p25 = scmp.ge.s32.totalorder %s24, 1
    %s26 = scalar_select %p25, 0, %s24
    %s27 = sadd.s32 1, %s18
    %s28 = scalar_select %p25, %s27, %s18
    %p29 = scmp.ge.s32.totalorder %s28, 2
    %s30 = scalar_select %p29, 0, %s28
    %s31 = ssub.s32 %s18, %s30
    %s32 = ssub.s32 %s19, %s26
    %s33 = sor.u32 %s31, %s32
    %p34 = scmp.eq.s32.totalorder %s33, 0
    %s36 = sadd.s32 %s35, 1
    %s37 = scalar_select %p34, %s35, %s36
    %p40 = pneg %p34
    %p41 = scmp.eq.s32.totalorder %s11, 1
    %p42 = por %p40, %p41
    %p43 = scmp.ne.s32.totalorder %s35, %s38
    %p44 = scmp.eq.s32.totalorder %s11, 0
    %p45 = por %p43, %p44
    %p46 = scmp.ne.s32.totalorder %s35, %s38
    %p47 = scmp.eq.s32.totalorder %s16, 1
    %p48 = por %p46, %p47
    %p49 = scmp.ne.s32.totalorder %s38, %s39
    %p50 = scmp.eq.s32.totalorder %s16, 0
    %p51 = por %p49, %p50
    %p52 = scmp.ne.s32.totalorder %s38, %s39
    %p53 = scmp.eq.s32.totalorder %s17, 1
    %p54 = por %p52, %p53
    %p56 = scmp.ne.s32.totalorder %s39, %s55
    %p57 = scmp.eq.s32.totalorder %s17, 0
    %p58 = por %p56, %p57
    %s60 = sadd.s32 %s59, 1
    %p63 = scmp.eq.s32.totalorder %s11, 1
    %p64 = scmp.ne.s32.totalorder %s59, %s61
    %p65 = scmp.eq.s32.totalorder %s11, 0
    %p66 = por %p64, %p65
    %p67 = scmp.ne.s32.totalorder %s59, %s61
    %p68 = scmp.eq.s32.totalorder %s16, 1
    %p69 = por %p67, %p68
    %p70 = scmp.ne.s32.totalorder %s61, %s62
    %p71 = scmp.eq.s32.totalorder %s16, 0
    %p72 = por %p70, %p71
    %p73 = scmp.ne.s32.totalorder %s61, %s62
    %p74 = scmp.eq.s32.totalorder %s17, 1
    %p75 = por %p73, %p74
    %p77 = scmp.ne.s32.totalorder %s62, %s76
    %p78 = scmp.eq.s32.totalorder %s17, 0
    %p79 = por %p77, %p78
    %s81 = sadd.s32 %s80, 1
    %p84 = scmp.eq.s32.totalorder %s11, 1
    %p85 = scmp.ne.s32.totalorder %s80, %s82
    %p86 = scmp.eq.s32.totalorder %s11, 0
    %p87 = por %p85, %p86
    %p88 = scmp.ne.s32.totalorder %s80, %s82
    %p89 = scmp.eq.s32.totalorder %s16, 1
    %p90 = por %p88, %p89
    %p91 = scmp.ne.s32.totalorder %s82, %s83
    %p92 = scmp.eq.s32.totalorder %s16, 0
    %p93 = por %p91, %p92
    %p94 = scmp.ne.s32.totalorder %s82, %s83
    %p95 = scmp.eq.s32.totalorder %s17, 1
    %p96 = por %p94, %p95
    %p98 = scmp.ne.s32.totalorder %s83, %s97
    %p99 = scmp.eq.s32.totalorder %s17, 0
    %p100 = por %p98, %p99
    %s101 = ssub.s32 %s18, %s30
    %s102 = ssub.s32 %s19, %s26
    %s103 = sor.u32 %s101, %s102
    %p104 = scmp.eq.s32.totalorder %s103, 0
    %s106 = sadd.s32 %s105, 1
    %s107 = scalar_select %p104, %s105, %s106
    %p110 = pneg %p104
    %p111 = scmp.eq.s32.totalorder %s11, 1
    %p112 = por %p110, %p111
    %p113 = scmp.ne.s32.totalorder %s105, %s108
    %p114 = scmp.eq.s32.totalorder %s11, 0
    %p115 = por %p113, %p114
    %p116 = scmp.ne.s32.totalorder %s105, %s108
    %p117 = scmp.eq.s32.totalorder %s16, 1
    %p118 = por %p116, %p117
    %p119 = scmp.ne.s32.totalorder %s108, %s109
    %p120 = scmp.eq.s32.totalorder %s16, 0
    %p121 = por %p119, %p120
    %p122 = scmp.ne.s32.totalorder %s108, %s109
    %p123 = scmp.eq.s32.totalorder %s17, 1
    %p124 = por %p122, %p123
    %p126 = scmp.ne.s32.totalorder %s109, %s125
    %p127 = scmp.eq.s32.totalorder %s17, 0
    %p128 = por %p126, %p127
    %s129 = ssub.s32 %s18, %s30
    %s130 = ssub.s32 %s19, %s26
    %s131 = sor.u32 %s129, %s130
    %p132 = scmp.eq.s32.totalorder %s131, 0
    %s134 = sadd.s32 %s133, 1
    %s135 = scalar_select %p132, %s133, %s134
    %p138 = pneg %p132
    %p139 = scmp.eq.s32.totalorder %s11, 1
    %p140 = por %p138, %p139
    %p141 = scmp.ne.s32.totalorder %s133, %s136
    %p142 = scmp.eq.s32.totalorder %s11, 0
    %p143 = por %p141, %p142
    %p144 = scmp.ne.s32.totalorder %s133, %s136
    %p145 = scmp.eq.s32.totalorder %s16, 1
    %p146 = por %p144, %p145
    %p147 = scmp.ne.s32.totalorder %s136, %s137
    %p148 = scmp.eq.s32.totalorder %s16, 0
    %p149 = por %p147, %p148
    %p150 = scmp.ne.s32.totalorder %s136, %s137
    %p151 = scmp.eq.s32.totalorder %s17, 1
    %p152 = por %p150, %p151
    %p154 = scmp.ne.s32.totalorder %s137, %s153
    %p155 = scmp.eq.s32.totalorder %s17, 0
    %p156 = por %p154, %p155
    %p157 = scmp.le.s32.totalorder 1, %s11
    %p158 = scmp.lt.s32.totalorder %s11, 3
    %p159 = pnand %p157, %p158
    %p160 = pneg %p159
    // Predicated region
    $region9: #{downsampler_block.2} parent=5 // pred_check
      _
    $region10: #{downsampler_block.2} parent=5 // pred_check_branch
      %162 = sbr.rel (%p159) target = $region12
    $region11: #{downsampler_block.2} parent=5 // pred_region
      %s163 = ssub.s32 %s11, 1
      // Predicated region
      $region13: #{downsampler_block.2} parent=11 // pred_check
        %p164 = pneg %p72
      $region14: #{downsampler_block.2} parent=11 // pred_check_branch
        %166 = sbr.rel (%p164) target = $region16
      $region15: #{downsampler_block.2} parent=11 // pred_region
        _
      $region16: #{downsampler_block.2} parent=11 // pred_fallthru
        _
      // Predicated region
      $region17: #{downsampler_block.2} parent=11 // pred_check
        %p167 = pneg %p93
      $region18: #{downsampler_block.2} parent=11 // pred_check_branch
        %169 = sbr.rel (%p167) target = $region20
      $region19: #{downsampler_block.2} parent=11 // pred_region
        _
      $region20: #{downsampler_block.2} parent=11 // pred_fallthru
        _
    $region12: #{downsampler_block.2} parent=5 // pred_fallthru
      _
    %p170 = scmp.lt.s32.totalorder %s11, 2
    // Predicated region
    $region21: #{downsampler_block.2} parent=5 // pred_check
      %p171 = pneg %p170
    $region22: #{downsampler_block.2} parent=5 // pred_check_branch
      %173 = sbr.rel (%p171) target = $region24
    $region23: #{downsampler_block.2} parent=5 // pred_region
      // Predicated region
      $region25: #{downsampler_block.2} parent=23 // pred_check
        %p174 = pneg %p45
      $region26: #{downsampler_block.2} parent=23 // pred_check_branch
        %176 = sbr.rel (%p174) target = $region28
      $region27: #{downsampler_block.2} parent=23 // pred_region
        %p177 = scmp.lt.s32.totalorder %s18, 1
        %s178 = scalar_select %p177, %s18, 1
        %p179 = scmp.lt.s32.totalorder %s19, 0
        %s180 = scalar_select %p179, %s19, 0
        %s181 = smul.addr %s178, 4
        %s182 = sadd.s32 %s180, %s181
        %s183 = smul.addr %s182, 4
        %s184 = scalar_lea.vmem %s0, %s183
      $region28: #{downsampler_block.2} parent=23 // pred_fallthru
        _
    $region24: #{downsampler_block.2} parent=5 // pred_fallthru
      _
    %p185 = scmp.le.s32.totalorder 1, %s11
    %p186 = scmp.lt.s32.totalorder %s11, 3
    %p187 = pnand %p185, %p186
    %p188 = pneg %p187
    // Predicated region
    $region29: #{downsampler_block.2} parent=5 // pred_check
      _
    $region30: #{downsampler_block.2} parent=5 // pred_check_branch
      %190 = sbr.rel (%p187) target = $region32
    $region31: #{downsampler_block.2} parent=5 // pred_region
      %s191 = ssub.s32 %s11, 1
      %p192 = scmp.lt.s32.totalorder %s20, 1
      %s193 = scalar_select %p192, %s20, 1
      %p194 = scmp.lt.s32.totalorder %s21, 0
      %s195 = scalar_select %p194, %s21, 0
      %s196 = smul.addr %s193, 4
      %s197 = sadd.s32 %s195, %s196
      %s198 = smul.addr %s197, 4
      %s199 = scalar_lea.vmem %s0, %s198
      %p200 = pneg %p51
      %p201 = pneg %p48
      %p202 = pneg %p72
      %p203 = pneg %p69
      %p204 = pneg %p93
      %p205 = pneg %p90
      %p206 = pneg %p121
      %p207 = pneg %p118
      %p208 = scmp.lt.s32.totalorder %s20, 1
      %s209 = scalar_select %p208, %s20, 1
      %p210 = scmp.lt.s32.totalorder %s21, 0
      %s211 = scalar_select %p210, %s21, 0
      %s212 = smul.addr %s209, 4
      %s213 = sadd.s32 %s211, %s212
      %s214 = smul.addr %s213, 4
      %s215 = scalar_lea.vmem %s3, %s214
      %p216 = pneg %p149
      %p217 = pneg %p146
      %p218 = scmp.lt.s32.totalorder %s20, 1
      %s219 = scalar_select %p218, %s20, 1
      %p220 = scmp.lt.s32.totalorder %s21, 0
      %s221 = scalar_select %p220, %s21, 0
      %s222 = sadd.s32 %s221, %s219
      %s223 = smul.addr %s222, 2
      %s224 = scalar_lea.vmem %s4, %s223
      %p225 = scmp.lt.s32.totalorder %s20, 1
      %s226 = scalar_select %p225, %s20, 1
      %p227 = scmp.lt.s32.totalorder %s21, 0
      %s228 = scalar_select %p227, %s21, 0
      %s229 = smul.addr %s226, 4
      %s230 = sadd.s32 %s228, %s229
      %s231 = smul.addr %s230, 4
      %s232 = scalar_lea.vmem %s0, %s231
      %p233 = scmp.lt.s32.totalorder %s20, 1
      %s234 = scalar_select %p233, %s20, 1
      %p235 = scmp.lt.s32.totalorder %s21, 0
      %s236 = scalar_select %p235, %s21, 0
      %s237 = smul.addr %s234, 4
      %s238 = sadd.s32 %s236, %s237
      %s239 = smul.addr %s238, 4
      %s240 = scalar_lea.vmem %s3, %s239
      %p241 = scmp.lt.s32.totalorder %s20, 1
      %s242 = scalar_select %p241, %s20, 1
      %p243 = scmp.lt.s32.totalorder %s21, 0
      %s244 = scalar_select %p243, %s21, 0
      %s245 = sadd.s32 %s244, %s242
      %s246 = smul.addr %s245, 2
      %s247 = scalar_lea.vmem %s4, %s246
      %v249 = vld [vmem:[%s232] sm:$0xf]
      %v250 = vld [vmem:[%s232 + $0x4] sm:$0xf]
      %v251 = vld [vmem:[%s232 + $0x8] sm:$0xf]
      %v252 = vld [vmem:[%s232 + $0xc] sm:$0x3]
      %v253 = vld [vmem:[%s1] sm:$0xf]
      %v254 = vld [vmem:[%s1 + $0x4] sm:$0xf]
      %v255 = vld [vmem:[%s1 + $0x8] sm:$0xf]
      %v256 = vld [vmem:[%s1 + $0xc] sm:$0x7]
      %v257 = vld [vmem:[%s2] sm:$0xff]
      %v258 = vld [vmem:[%s2 + $0x8] sm:$0xff]
      %v259 = vld [vmem:[%s2 + $0x10] sm:$0xff]
      %v260 = vld [vmem:[%s2 + $0x18] sm:$0x1f]
      %262 = vset.pattern.permute.xlu0 0
      %263 = vperm.xlu0 %262, %v257
      %v264 = vpop.permute.xlu0 %263
      %267 = vset.pattern.permute.xlu0 0
      %268 = vperm.xlu0 %267, %v258
      %v269 = vpop.permute.xlu0 %268
      %272 = vset.pattern.permute.xlu0 0
      %273 = vperm.xlu0 %272, %v259
      %v274 = vpop.permute.xlu0 %273
      %277 = vset.pattern.permute.xlu0 0
      %278 = vperm.xlu0 %277, %v260
      %v279 = vpop.permute.xlu0 %278
      %v285 = vunpack.c.l.b16 %v253
      %v286 = vunpack.c.l.b16 %v254
      %v287 = vunpack.c.l.b16 %v255
      %v288 = vunpack.c.l.b16 %v256
      %v289 = vpack.c.b16 %v286, %v285
      %v290 = vpack.c.b16 %v288, %v287
      %v295 = vunpack.c.l.b16 %v249
      %v296 = vunpack.c.l.b16 %v250
      %v297 = vunpack.c.l.b16 %v251
      %v298 = vunpack.c.l.b16 %v252
      %v299 = vpack.c.b16 %v296, %v295
      %v300 = vpack.c.b16 %v298, %v297
      %vm302 = vcmask 220160
      %v304 = vsel %vm302, %v289, 0
      %v307 = vsel %vm302, %v290, 0
      %vm309 = vcmask 1044480
      %vm310 = vcmask 1045504
      %v311 = vsel %vm309, 4294967295, 65535
      %v312 = vsel %vm310, %v311, 0
      %v314 = vand.u32 %v300, %v312
      %316 = vmatprep.subr.bf16.mxu0 0
      %317 = vmatpush1.bf16.msra.mxu0 %v299
      %318 = vmatprep.subr.bf16.mxu0 0
      %319 = vmatpush1.bf16.msra.mxu0 %v314
      %320 = vmatprep.subr.bf16.mxu0 0
      %321 = vmatpush1.bf16.msra.mxu0 0
      %322 = vmatprep.subr.bf16.mxu0 0
      %323 = vmatpush1.bf16.msra.mxu0 0
      %324 = vmatprep.subr.bf16.mxu0 0
      %325 = vmatpush1.bf16.msra.mxu0 0
      %326 = vmatprep.subr.bf16.mxu0 0
      %327 = vmatpush1.bf16.msra.mxu0 0
      %328 = vmatprep.subr.bf16.mxu0 0
      %329 = vmatpush1.bf16.msra.mxu0 0
      %330 = vmatprep.subr.bf16.mxu0 0
      %331 = vmatpush1.bf16.msra.mxu0 0
      %332 = vmatprep.subr.bf16.mxu0 0
      %333 = vmatpush1.bf16.msra.mxu0 0
      %334 = vmatprep.subr.bf16.mxu0 0
      %335 = vmatpush1.bf16.msra.mxu0 0
      %336 = vmatprep.subr.bf16.mxu0 0
      %337 = vmatpush1.bf16.msra.mxu0 0
      %338 = vmatprep.subr.bf16.mxu0 0
      %339 = vmatpush1.bf16.msra.mxu0 0
      %340 = vmatprep.subr.bf16.mxu0 0
      %341 = vmatpush1.bf16.msra.mxu0 0
      %342 = vmatprep.subr.bf16.mxu0 0
      %343 = vmatpush1.bf16.msra.mxu0 0
      %344 = vmatprep.subr.bf16.mxu0 0
      %345 = vmatpush1.bf16.msra.mxu0 0
      %346 = vmatprep.subr.bf16.mxu0 0
      %347 = vmatpush1.bf16.msra.mxu0 0
      %348 = vmatprep.mubr.bf16.mxu0 0
      %349 = vmatmul.mubr.bf16.gmra.mrb[0].mxu0 %v304
      %v350 = vpop.f32.mrb[0].mxu0
      %v351 = vadd.f32 %v264, %v350
      %v352 = vpop.f32.mrb[0].mxu0
      %v353 = vpop.f32.mrb[0].mxu0
      %v354 = vadd.f32 %v269, %v353
      %v355 = vpop.f32.mrb[0].mxu0
      %356 = vmatprep.mubr.bf16.mxu0 0
      %357 = vmatmul.mubr.bf16.gmra.mrb[0].mxu0 %v307
      %v358 = vpop.f32.mrb[0].mxu0
      %v359 = vadd.f32 %v274, %v358
      %v360 = vpop.f32.mrb[0].mxu0
      %v361 = vpop.f32.mrb[0].mxu0
      %v362 = vadd.f32 %v279, %v361
      %v363 = vpop.f32.mrb[0].mxu0
      %364 = vdwg.mxu0
      %vm365 = vsmask.f32 2304
      %vm366 = vsmask.f32 6416
      %vm367 = vmor %vm365, %vm366
      %v369 = vshrl.u32 %v250, 16
      %v371 = vrot.slane %v369, 5
      %v372 = vrot.slane %v371, 4
      %v374 = vshrl.u32 %v251, 16
      %v376 = vrot.slane %v374, 5
      %v377 = vshll.u32 %v251, 16
      %v379 = vrot.slane %v377, 6
      %v380 = vor.u32 %v376, %v379
      %v381 = vsel %vm367, %v372, %v380
      %v383 = vmax.bf16 %v250, %v381
      %v385 = vshrl.u32 %v252, 16
      %v387 = vrot.slane %v385, 5
      %v388 = vshll.u32 %v252, 16
      %v390 = vrot.slane %v388, 6
      %v391 = vor.u32 %v387, %v390
      %v393 = vmax.bf16 %v251, %v391
      %v395 = vshrl.u32 %v393, 16
      %v397 = vrot.slane %v395, 4
      %v398 = vshll.u32 %v393, 16
      %v400 = vrot.slane %v398, 5
      %v401 = vor.u32 %v397, %v400
      %v402 = vrot.slane %v401, 4
      %v404 = vmax.bf16 %v383, %v402
      %v405 = vunpack.c.l.bf16 %v404
      %v407 = vrot.slane %v405, 7
      %v409 = vsel %vm309, %v362, %v407
      %vm410 = vcmask 523264
      %v411 = vsel %vm410, %v351, 0.0
      %412 = vadd.xlane.f32.xlu0 %v411
      %v413 = vpop.xlane.xlu0 %412
      %v414 = vsel %vm410, %v354, 0.0
      %415 = vadd.xlane.f32.xlu0 %v414
      %v416 = vpop.xlane.xlu0 %415
      %v417 = vsel %vm410, %v359, 0.0
      %418 = vadd.xlane.f32.xlu0 %v417
      %v419 = vpop.xlane.xlu0 %418
      %v420 = vsel %vm410, %v409, 0.0
      %421 = vadd.xlane.f32.xlu0 %v420
      %v422 = vpop.xlane.xlu0 %421
      %v423 = vmul.f32 %v351, %v351
      %v424 = vmul.f32 %v354, %v354
      %v425 = vmul.f32 %v359, %v359
      %v426 = vmul.f32 %v409, %v409
      %v427 = vsel %vm410, %v423, 0.0
      %428 = vadd.xlane.f32.xlu0 %v427
      %v429 = vpop.xlane.xlu0 %428
      %v430 = vsel %vm410, %v424, 0.0
      %431 = vadd.xlane.f32.xlu0 %v430
      %v432 = vpop.xlane.xlu0 %431
      %v433 = vsel %vm410, %v425, 0.0
      %434 = vadd.xlane.f32.xlu0 %v433
      %v435 = vpop.xlane.xlu0 %434
      %v436 = vsel %vm410, %v426, 0.0
      %437 = vadd.xlane.f32.xlu0 %v436
      %v438 = vpop.xlane.xlu0 %437
      %v443 = vlaneseq
      %v444 = vand.u32 %v443, 127
      %v445 = vlaneseq
      %v446 = vshrl.u32 %v445, 7
      %v447 = vsub.s32 %v444, %v446
      %v448 = vrot.slane %v413, %v447
      %v449 = vadd.s32 %v444, 4294967288
      %v450 = vlaneseq
      %v451 = vshrl.u32 %v450, 7
      %v452 = vsub.s32 %v449, %v451
      %v453 = vrot.slane %v416, %v452
      %vm454 = vcmask 130112
      %v455 = vsel %vm454, %v453, %v448
      %v456 = vadd.s32 %v444, 4294967280
      %v457 = vlaneseq
      %v458 = vshrl.u32 %v457, 7
      %v459 = vsub.s32 %v456, %v458
      %v460 = vrot.slane %v419, %v459
      %vm461 = vcmask 195712
      %v462 = vsel %vm461, %v460, %v455
      %v463 = vadd.s32 %v444, 4294967272
      %v464 = vlaneseq
      %v465 = vshrl.u32 %v464, 7
      %v466 = vsub.s32 %v463, %v465
      %v467 = vrot.slane %v422, %v466
      %vm468 = vcmask 261312
      %v469 = vsel %vm468, %v467, %v462
      %v475 = vlaneseq
      %v476 = vshrl.u32 %v475, 7
      %v477 = vsub.s32 %v444, %v476
      %v478 = vrot.slane %v429, %v477
      %v479 = vlaneseq
      %v480 = vshrl.u32 %v479, 7
      %v481 = vsub.s32 %v449, %v480
      %v482 = vrot.slane %v432, %v481
      %v483 = vsel %vm454, %v482, %v478
      %v484 = vlaneseq
      %v485 = vshrl.u32 %v484, 7
      %v486 = vsub.s32 %v456, %v485
      %v487 = vrot.slane %v435, %v486
      %v488 = vsel %vm461, %v487, %v483
      %v489 = vlaneseq
      %v490 = vshrl.u32 %v489, 7
      %v491 = vsub.s32 %v463, %v490
      %v492 = vrot.slane %v438, %v491
      %v493 = vsel %vm468, %v492, %v488
      %vm495 = vcmask 1040384
      %v496 = vsel %vm495, %v469, %v493
      %vm497 = vcmask 254976
      %498 = vst.msk [vmem:[%s247] sm:$0x3] %vm497, %v496
      %v499 = vpack.c.bf16 %v354, %v351
      %v500 = vpack.c.bf16 %v409, %v359
      %v503 = vunpack.c.l.b16 %v499
      %v504 = vunpack.c.h.b16 %v499
      %v505 = vunpack.c.l.b16 %v500
      %v506 = vunpack.c.h.b16 %v500
      %v507 = vpack.c.b16 %v503, %v503
      %v508 = vpack.c.b16 %v504, %v504
      %v509 = vpack.c.b16 %v505, %v505
      %v510 = vpack.c.b16 %v506, %v506
      %vm515 = vcmask 519168
      %516 = vst.msk [vmem:[%s240] sm:$0xf] %vm515, %v507
      %517 = vst.msk [vmem:[%s240 + $0x4] sm:$0xf] %vm515, %v508
      %518 = vst.msk [vmem:[%s240 + $0x8] sm:$0xf] %vm515, %v509
      %519 = vst.msk [vmem:[%s240 + $0xc] sm:$0xf] %vm515, %v510
      %p520 = scmp.lt.s32.totalorder %s20, 1
      %s521 = scalar_select %p520, %s20, 1
      %p522 = scmp.lt.s32.totalorder %s21, 0
      %s523 = scalar_select %p522, %s21, 0
      %s524 = smul.addr %s521, 4
      %s525 = sadd.s32 %s523, %s524
      %s526 = smul.addr %s525, 4
      %s527 = scalar_lea.vmem %s3, %s526
      %p528 = scmp.lt.s32.totalorder %s20, 1
      %s529 = scalar_select %p528, %s20, 1
      %p530 = scmp.lt.s32.totalorder %s21, 0
      %s531 = scalar_select %p530, %s21, 0
      %s532 = sadd.s32 %s531, %s529
      %s533 = smul.addr %s532, 2
      %s534 = scalar_lea.vmem %s4, %s533
      // Predicated region
      $region33: #{downsampler_block.2} parent=31 // pred_check
        %p535 = pneg %p118
      $region34: #{downsampler_block.2} parent=31 // pred_check_branch
        %537 = sbr.rel (%p535) target = $region36
      $region35: #{downsampler_block.2} parent=31 // pred_region
        _
      $region36: #{downsampler_block.2} parent=31 // pred_fallthru
        _
      // Predicated region
      $region37: #{downsampler_block.2} parent=31 // pred_check
        %p538 = pneg %p146
      $region38: #{downsampler_block.2} parent=31 // pred_check_branch
        %540 = sbr.rel (%p538) target = $region40
      $region39: #{downsampler_block.2} parent=31 // pred_region
        _
      $region40: #{downsampler_block.2} parent=31 // pred_fallthru
        _
    $region32: #{downsampler_block.2} parent=5 // pred_fallthru
      _
    %p541 = scmp.le.s32.totalorder 2, %s11
    // Predicated region
    $region41: #{downsampler_block.2} parent=5 // pred_check
      %p542 = pneg %p541
    $region42: #{downsampler_block.2} parent=5 // pred_check_branch
      %544 = sbr.rel (%p542) target = $region44
    $region43: #{downsampler_block.2} parent=5 // pred_region
      %s545 = ssub.s32 %s11, 2
      // Predicated region
      $region45: #{downsampler_block.2} parent=43 // pred_check
        %p546 = pneg %p124
      $region46: #{downsampler_block.2} parent=43 // pred_check_branch
        %548 = sbr.rel (%p546) target = $region48
      $region47: #{downsampler_block.2} parent=43 // pred_region
        %p549 = scmp.lt.s32.totalorder %s22, 1
        %s550 = scalar_select %p549, %s22, 1
        %p551 = scmp.lt.s32.totalorder %s23, 0
        %s552 = scalar_select %p551, %s23, 0
        %s553 = smul.addr %s550, 4
        %s554 = sadd.s32 %s552, %s553
        %s555 = smul.addr %s554, 4
        %s556 = scalar_lea.vmem %s3, %s555
      $region48: #{downsampler_block.2} parent=43 // pred_fallthru
        _
      // Predicated region
      $region49: #{downsampler_block.2} parent=43 // pred_check
        %p557 = pneg %p152
      $region50: #{downsampler_block.2} parent=43 // pred_check_branch
        %559 = sbr.rel (%p557) target = $region52
      $region51: #{downsampler_block.2} parent=43 // pred_region
        %p560 = scmp.lt.s32.totalorder %s22, 1
        %s561 = scalar_select %p560, %s22, 1
        %p562 = scmp.lt.s32.totalorder %s23, 0
        %s563 = scalar_select %p562, %s23, 0
        %s564 = sadd.s32 %s563, %s561
        %s565 = smul.addr %s564, 2
        %s566 = scalar_lea.vmem %s4, %s565
      $region52: #{downsampler_block.2} parent=43 // pred_fallthru
        _
    $region44: #{downsampler_block.2} parent=5 // pred_fallthru
      _
  $region6: #{downsampler_block.2} parent=0 // loop_footer
    %s15 = sadd.s32 1, %s11
  $region7: #{downsampler_block.2} parent=0 // loop_footer_branch
    %10 = sbr.rel target = $region3
  $region8: #{downsampler_block.2} parent=0 // loop_exit
    _

</llo_original>
